<compile_context>
chip_gen: v5e
topology: v5e:2x2
jax: 0.10.0
libtpu: 0.0.40
codegen_flags: <defaults>
</compile_context>

<pallas_src>
import functools

import jax
import jax.numpy as jnp
from jax.experimental import pallas as pl
from jax.experimental.pallas import tpu as pltpu

EPS = 1e-5  # PyTorch InstanceNorm2d default eps (affine=False by default)


# ---------------------------------------------------------------------------
# In-kernel helpers (operate on channel-major (C, H*W) VMEM values)
# ---------------------------------------------------------------------------
def _conv3x3(x, wft, masks, W):
    """3x3 reflect-padded conv, channel-major, single MXU contraction.

    x:    (C, H*W) f32 image
    wft:  (C, 9*C) bf16 folded weight, wft[co, (kh*3+kw)*C + ci] = w[kh,kw,ci,co]
    out:  (C, H*W) f32
    """
    row0, rowL, col0, colL = masks
    HW = x.shape[-1]

    def lroll(t, s):  # circular roll along the lane (flattened spatial) axis
        return pltpu.roll(t, shift=s % HW, axis=1)

    # Row-shifted images (reflection at top/bottom borders).
    rp = lroll(x, W)    # brings row h-1 to row h (wraps at h=0)
    rm = lroll(x, -W)   # brings row h+1 to row h (wraps at h=H-1)
    rows = (
        jnp.where(row0, rm, rp),   # row offset -1: reflected row 1 at h=0
        x,                         # row offset  0
        jnp.where(rowL, rp, rm),   # row offset +1: reflected row H-2 at h=H-1
    )

    # Column shifts (reflection at left/right borders) -> 9 taps.
    taps = []
    for xr in rows:
        cp = lroll(xr, 1)     # brings col w-1 to col w
        cm = lroll(xr, -1)    # brings col w+1 to col w
        taps.append(jnp.where(col0, cm, cp))   # col offset -1
        taps.append(xr)                        # col offset  0
        taps.append(jnp.where(colL, cp, cm))   # col offset +1

    patch = jnp.concatenate(taps, axis=0).astype(wft.dtype)   # (9C, H*W) bf16
    # One MXU contraction: (C, 9C) @ (9C, H*W) -> (C, H*W), f32 accumulate.
    return jnp.dot(wft, patch, preferred_element_type=jnp.float32)


def _instance_norm(y, inv_hw):
    """Per-channel normalization over the lane (spatial) axis, single pass."""
    mean = jnp.sum(y, axis=1, keepdims=True) * inv_hw
    msq = jnp.sum(y * y, axis=1, keepdims=True) * inv_hw
    var = jnp.maximum(msq - mean * mean, 0.0)   # clamp f32 cancellation
    return (y - mean) * jax.lax.rsqrt(var + EPS)


def resnet_block_kernel(x_ref, w1_ref, w2_ref, o_ref, *, H, W):
    Bn, C, HW = x_ref.shape

    # Border masks over the within-image flattened spatial axis, shape (1, HW)
    # (broadcast over channels); computed once per step, shared by both convs
    # and all Bn images.  Power-of-two W uses shift/and (cheap on the VPU).
    lane = jax.lax.broadcasted_iota(jnp.int32, (1, HW), 1)
    if (W & (W - 1)) == 0:
        col = lane & (W - 1)
        row = lane >> (W.bit_length() - 1)
    else:
        col = lane % W
        row = lane // W
    masks = (row == 0, row == H - 1, col == 0, col == W - 1)

    inv_hw = jnp.float32(1.0 / HW)
    w1 = w1_ref[...]                          # (C, 9C) bf16, loaded once
    w2 = w2_ref[...]

    # Static unroll over the images of this block (Bn is small).  For large Bn
    # switch to lax.fori_loop(..., unroll=True) to bound live ranges.
    for b in range(Bn):
        x = x_ref[b].astype(jnp.float32)      # (C, H*W)
        y = _conv3x3(x, w1, masks, W)         # conv1 (bias cancelled by IN)
        y = _instance_norm(y, inv_hw)         # InstanceNorm2d(affine=False)
        y = jnp.maximum(y, 0.0)               # ReLU(inplace=True)
        y = _conv3x3(y, w2, masks, W)         # conv2 (bias cancelled by IN)
        y = _instance_norm(y, inv_hw)
        o_ref[b] = (x + y).astype(o_ref.dtype)   # residual, lane-dense store


# ---------------------------------------------------------------------------
# Wrapper
# ---------------------------------------------------------------------------
def resnet_block(x_nchw, w1, b1, w2, b2, *, images_per_step=None):
    """PyTorch-facing entry point.

    x_nchw: (N, C, H, W) float32
    w1, w2: HWIO conv weights (3, 3, C, C)
    b1, b2: accepted for interface fidelity but unused -- the conv bias is
            mathematically cancelled by InstanceNorm2d(affine=False).
    """
    del b1, b2
    N, C, H, W = x_nchw.shape
    HW = H * W
    x = x_nchw.reshape(N, C, HW)              # contiguous reshape, no transpose

    if images_per_step is None:
        # >= 2 grid steps keeps both v7x TensorCores fed via "parallel";
        # on single-TC v5e/v6e the extra step costs ~0.35 us (noise).
        images_per_step = max(1, pl.cdiv(N, 2))
    Bn = min(images_per_step, N)
    grid_n = pl.cdiv(N, Bn)

    # Rough per-step VMEM: double-buffered in/out blocks + weights + per-image
    # temporaries (9 f32 taps + bf16 patch + norm scratch).  For realistic
    # ResNet sizes (C >= 128, H = W = 64) chunk the im2col+dot over HW tiles
    # inside _conv3x3 and set pltpu.CompilerParams(vmem_limit_bytes=...).
    vmem_est = 4 * Bn * C * HW * 4 + 4 * C * 9 * C * 2 + C * HW * (9 * 4 + 9 * 2 + 16)
    assert vmem_est < 24 * 1024 * 1024, (
        f"per-step VMEM estimate {vmem_est} B too large; reduce images_per_step "
        "or add HW chunking in _conv3x3")

    def fold(w):  # HWIO (3,3,Cin,Cout) -> (Cout, 9*Cin) bf16 MXU operand
        return jnp.transpose(w, (3, 0, 1, 2)).reshape(C, 9 * C).astype(jnp.bfloat16)

    img_spec = pl.BlockSpec((Bn, C, HW), lambda n: (n, 0, 0))
    # Weights use a constant index_map, so they are DMA'd only once even though
    # the grid revisits them; at large C, pipeline_mode=pl.Buffered(1) would
    # also drop the second VMEM buffer (negligible at C=8).
    w_spec = pl.BlockSpec((C, 9 * C), lambda n: (0, 0))

    out = pl.pallas_call(
        functools.partial(resnet_block_kernel, H=H, W=W),
        out_shape=jax.ShapeDtypeStruct((N, C, HW), x_nchw.dtype),
        grid_spec=pltpu.PrefetchScalarGridSpec(
            num_scalar_prefetch=0,
            grid=(grid_n,),
            in_specs=[img_spec, w_spec, w_spec],
            out_specs=img_spec,
        ),
        compiler_params=pltpu.CompilerParams(
            dimension_semantics=("parallel",)),
    )(x, fold(w1), fold(w2))
    return out.reshape(N, C, H, W)


# ---------------------------------------------------------------------------
# Pure-JAX f32 reference (keeps the conv bias; validates the cancellation)
# ---------------------------------------------------------------------------
def resnet_block_ref(x_nchw, w1, b1, w2, b2):
    x = jnp.transpose(x_nchw, (0, 2, 3, 1))

    def conv(t, w, b):
        tp = jnp.pad(t, ((0, 0), (1, 1), (1, 1), (0, 0)), mode="reflect")
        y = jax.lax.conv_general_dilated(
            tp, w, window_strides=(1, 1), padding="VALID",
            dimension_numbers=("NHWC", "HWIO", "NHWC"))
        return y + b[None, None, None, :]

    def inorm(t):
        m = jnp.mean(t, axis=(1, 2), keepdims=True)
        v = jnp.mean((t - m) ** 2, axis=(1, 2), keepdims=True)
        return (t - m) * jax.lax.rsqrt(v + EPS)

    y = jnp.maximum(inorm(conv(x, w1, b1)), 0.0)
    y = inorm(conv(y, w2, b2))
    return jnp.transpose(x + y, (0, 3, 1, 2))


# ---------------------------------------------------------------------------
if __name__ == "__main__":
    N, dim, H, W = 4, 8, 16, 16          # dim == channel count of ResNetBlock

    key = jax.random.PRNGKey(0)
    kx, kw1, kb1, kw2, kb2 = jax.random.split(key, 5)

    x = jax.random.normal(kx, (N, dim, H, W), dtype=jnp.float32)   # NCHW input
    # Synthetic parameters (HWIO conv weights, per-channel bias)
    w1 = 0.1 * jax.random.normal(kw1, (3, 3, dim, dim), dtype=jnp.float32)
    b1 = 0.1 * jax.random.normal(kb1, (dim,), dtype=jnp.float32)
    w2 = 0.1 * jax.random.normal(kw2, (3, 3, dim, dim), dtype=jnp.float32)
    b2 = 0.1 * jax.random.normal(kb2, (dim,), dtype=jnp.float32)

    out = jax.block_until_ready(resnet_block(x, w1, b1, w2, b2))
    ref = jax.block_until_ready(resnet_block_ref(x, w1, b1, w2, b2))

    assert out.shape == (N, dim, H, W)
    # Tolerance accounts for bf16 MXU operands (f32 accumulation).
    assert jnp.allclose(out, ref, rtol=3e-2, atol=3e-2), (
        f"max abs err = {float(jnp.max(jnp.abs(out - ref)))}")

    print("KERNEL_OK")
</pallas_src>

<mosaic_0001>
module attributes {stable_mosaic.version = 11 : i64} {
  func.func @resnet_block_kernel(%arg0: i32, %arg1: memref<2x8x256xf32, #tpu.memory_space<vmem>>, %arg2: memref<8x72xbf16, #tpu.memory_space<vmem>>, %arg3: memref<8x72xbf16, #tpu.memory_space<vmem>>, %arg4: memref<2x8x256xf32, #tpu.memory_space<vmem>>) attributes {dimension_semantics = [#tpu.dimension_semantics<parallel>], iteration_bounds = array<i64: 2>, scalar_prefetch = 0 : i64, scratch_operands = 0 : i64, tpu.core_type = #tpu.core_type<tc>, window_params = [{transform_indices = @transform_0, window_bounds = array<i64: 2, 8, 256>}, {pipeline_mode = #tpu.pipeline_mode<synchronous>, transform_indices = @transform_1, window_bounds = array<i64: 8, 72>}, {pipeline_mode = #tpu.pipeline_mode<synchronous>, transform_indices = @transform_2, window_bounds = array<i64: 8, 72>}, {transform_indices = @transform_3, window_bounds = array<i64: 2, 8, 256>}]} {
    %0 = tpu.iota {dimensions = array<i32: 1>} : vector<1x256xi32>
    %c15_i32 = arith.constant 15 : i32
    %1 = vector.broadcast %c15_i32 : i32 to vector<1x256xi32>
    %2 = arith.andi %0, %1 : vector<1x256xi32>
    %c4_i32 = arith.constant 4 : i32
    %3 = vector.broadcast %c4_i32 : i32 to vector<1x256xi32>
    %4 = arith.shrsi %0, %3 : vector<1x256xi32>
    %c0_i32 = arith.constant 0 : i32
    %5 = vector.broadcast %c0_i32 : i32 to vector<1x256xi32>
    %6 = arith.cmpi eq, %4, %5 : vector<1x256xi32>
    %c15_i32_0 = arith.constant 15 : i32
    %7 = vector.broadcast %c15_i32_0 : i32 to vector<1x256xi32>
    %8 = arith.cmpi eq, %4, %7 : vector<1x256xi32>
    %c0_i32_1 = arith.constant 0 : i32
    %9 = vector.broadcast %c0_i32_1 : i32 to vector<1x256xi32>
    %10 = arith.cmpi eq, %2, %9 : vector<1x256xi32>
    %c15_i32_2 = arith.constant 15 : i32
    %11 = vector.broadcast %c15_i32_2 : i32 to vector<1x256xi32>
    %12 = arith.cmpi eq, %2, %11 : vector<1x256xi32>
    %c0 = arith.constant 0 : index
    %c0_3 = arith.constant 0 : index
    %13 = vector.load %arg2[%c0, %c0_3] : memref<8x72xbf16, #tpu.memory_space<vmem>>, vector<8x72xbf16>
    %c0_4 = arith.constant 0 : index
    %c0_5 = arith.constant 0 : index
    %14 = vector.load %arg3[%c0_4, %c0_5] : memref<8x72xbf16, #tpu.memory_space<vmem>>, vector<8x72xbf16>
    %c0_6 = arith.constant 0 : index
    %c0_7 = arith.constant 0 : index
    %c0_8 = arith.constant 0 : index
    %15 = vector.load %arg1[%c0_6, %c0_7, %c0_8] : memref<2x8x256xf32, #tpu.memory_space<vmem>>, vector<1x8x256xf32>
    %16 = vector.shape_cast %15 : vector<1x8x256xf32> to vector<8x256xf32>
    %c16_i32 = arith.constant 16 : i32
    %17 = tpu.dynamic_rotate %16 by %c16_i32 dim 1 : vector<8x256xf32>, i32 -> vector<8x256xf32>
    %c240_i32 = arith.constant 240 : i32
    %18 = tpu.dynamic_rotate %16 by %c240_i32 dim 1 : vector<8x256xf32>, i32 -> vector<8x256xf32>
    %19 = vector.shape_cast %6 : vector<1x256xi1> to vector<1x256xi1>
    %20 = vector.broadcast %19 : vector<1x256xi1> to vector<8x256xi1>
    %21 = arith.select %20, %18, %17 : vector<8x256xi1>, vector<8x256xf32>
    %22 = vector.shape_cast %8 : vector<1x256xi1> to vector<1x256xi1>
    %23 = vector.broadcast %22 : vector<1x256xi1> to vector<8x256xi1>
    %24 = arith.select %23, %17, %18 : vector<8x256xi1>, vector<8x256xf32>
    %c1_i32 = arith.constant 1 : i32
    %25 = tpu.dynamic_rotate %21 by %c1_i32 dim 1 : vector<8x256xf32>, i32 -> vector<8x256xf32>
    %c255_i32 = arith.constant 255 : i32
    %26 = tpu.dynamic_rotate %21 by %c255_i32 dim 1 : vector<8x256xf32>, i32 -> vector<8x256xf32>
    %27 = vector.shape_cast %10 : vector<1x256xi1> to vector<1x256xi1>
    %28 = vector.broadcast %27 : vector<1x256xi1> to vector<8x256xi1>
    %29 = arith.select %28, %26, %25 : vector<8x256xi1>, vector<8x256xf32>
    %30 = vector.shape_cast %12 : vector<1x256xi1> to vector<1x256xi1>
    %31 = vector.broadcast %30 : vector<1x256xi1> to vector<8x256xi1>
    %32 = arith.select %31, %25, %26 : vector<8x256xi1>, vector<8x256xf32>
    %c1_i32_9 = arith.constant 1 : i32
    %33 = tpu.dynamic_rotate %16 by %c1_i32_9 dim 1 : vector<8x256xf32>, i32 -> vector<8x256xf32>
    %c255_i32_10 = arith.constant 255 : i32
    %34 = tpu.dynamic_rotate %16 by %c255_i32_10 dim 1 : vector<8x256xf32>, i32 -> vector<8x256xf32>
    %35 = vector.shape_cast %10 : vector<1x256xi1> to vector<1x256xi1>
    %36 = vector.broadcast %35 : vector<1x256xi1> to vector<8x256xi1>
    %37 = arith.select %36, %34, %33 : vector<8x256xi1>, vector<8x256xf32>
    %38 = vector.shape_cast %12 : vector<1x256xi1> to vector<1x256xi1>
    %39 = vector.broadcast %38 : vector<1x256xi1> to vector<8x256xi1>
    %40 = arith.select %39, %33, %34 : vector<8x256xi1>, vector<8x256xf32>
    %c1_i32_11 = arith.constant 1 : i32
    %41 = tpu.dynamic_rotate %24 by %c1_i32_11 dim 1 : vector<8x256xf32>, i32 -> vector<8x256xf32>
    %c255_i32_12 = arith.constant 255 : i32
    %42 = tpu.dynamic_rotate %24 by %c255_i32_12 dim 1 : vector<8x256xf32>, i32 -> vector<8x256xf32>
    %43 = vector.shape_cast %10 : vector<1x256xi1> to vector<1x256xi1>
    %44 = vector.broadcast %43 : vector<1x256xi1> to vector<8x256xi1>
    %45 = arith.select %44, %42, %41 : vector<8x256xi1>, vector<8x256xf32>
    %46 = vector.shape_cast %12 : vector<1x256xi1> to vector<1x256xi1>
    %47 = vector.broadcast %46 : vector<1x256xi1> to vector<8x256xi1>
    %48 = arith.select %47, %41, %42 : vector<8x256xi1>, vector<8x256xf32>
    %49 = tpu.concatenate %29, %21, %32, %37, %16, %40, %45, %24, %48 in 0 : vector<8x256xf32>, vector<8x256xf32>, vector<8x256xf32>, vector<8x256xf32>, vector<8x256xf32>, vector<8x256xf32>, vector<8x256xf32>, vector<8x256xf32>, vector<8x256xf32> -> vector<72x256xf32>
    %50 = arith.truncf %49 : vector<72x256xf32> to vector<72x256xbf16>
    %cst = arith.constant dense<0.000000e+00> : vector<8x256xf32>
    %51 = tpu.matmul %13, %50, %cst {dimension_numbers = #tpu.dot_dimension_numbers<[1], [0], [0], [1], [0, 0, 1, 1], [], []>} : vector<8x72xbf16>, vector<72x256xbf16>, vector<8x256xf32> -> vector<8x256xf32>
    %cst_13 = arith.constant dense<0.000000e+00> : vector<8xf32>
    %52 = vector.multi_reduction <add>, %51, %cst_13 [1] : vector<8x256xf32> to vector<8xf32>
    %53 = vector.shape_cast %52 : vector<8xf32> to vector<8x1xf32>
    %cst_14 = arith.constant 3.906250e-03 : f32
    %54 = vector.broadcast %cst_14 : f32 to vector<8x1xf32>
    %55 = arith.mulf %53, %54 : vector<8x1xf32>
    %56 = arith.mulf %51, %51 : vector<8x256xf32>
    %cst_15 = arith.constant dense<0.000000e+00> : vector<8xf32>
    %57 = vector.multi_reduction <add>, %56, %cst_15 [1] : vector<8x256xf32> to vector<8xf32>
    %58 = vector.shape_cast %57 : vector<8xf32> to vector<8x1xf32>
    %cst_16 = arith.constant 3.906250e-03 : f32
    %59 = vector.broadcast %cst_16 : f32 to vector<8x1xf32>
    %60 = arith.mulf %58, %59 : vector<8x1xf32>
    %61 = arith.mulf %55, %55 : vector<8x1xf32>
    %62 = arith.subf %60, %61 : vector<8x1xf32>
    %cst_17 = arith.constant 0.000000e+00 : f32
    %63 = vector.broadcast %cst_17 : f32 to vector<8x1xf32>
    %64 = arith.maximumf %62, %63 : vector<8x1xf32>
    %65 = vector.broadcast %55 : vector<8x1xf32> to vector<8x256xf32>
    %66 = arith.subf %51, %65 : vector<8x256xf32>
    %cst_18 = arith.constant 9.99999974E-6 : f32
    %67 = vector.broadcast %cst_18 : f32 to vector<8x1xf32>
    %68 = arith.addf %64, %67 : vector<8x1xf32>
    %69 = math.rsqrt %68 : vector<8x1xf32>
    %70 = vector.broadcast %69 : vector<8x1xf32> to vector<8x256xf32>
    %71 = arith.mulf %66, %70 : vector<8x256xf32>
    %cst_19 = arith.constant 0.000000e+00 : f32
    %72 = vector.broadcast %cst_19 : f32 to vector<8x256xf32>
    %73 = arith.maximumf %71, %72 : vector<8x256xf32>
    %c16_i32_20 = arith.constant 16 : i32
    %74 = tpu.dynamic_rotate %73 by %c16_i32_20 dim 1 : vector<8x256xf32>, i32 -> vector<8x256xf32>
    %c240_i32_21 = arith.constant 240 : i32
    %75 = tpu.dynamic_rotate %73 by %c240_i32_21 dim 1 : vector<8x256xf32>, i32 -> vector<8x256xf32>
    %76 = vector.shape_cast %6 : vector<1x256xi1> to vector<1x256xi1>
    %77 = vector.broadcast %76 : vector<1x256xi1> to vector<8x256xi1>
    %78 = arith.select %77, %75, %74 : vector<8x256xi1>, vector<8x256xf32>
    %79 = vector.shape_cast %8 : vector<1x256xi1> to vector<1x256xi1>
    %80 = vector.broadcast %79 : vector<1x256xi1> to vector<8x256xi1>
    %81 = arith.select %80, %74, %75 : vector<8x256xi1>, vector<8x256xf32>
    %c1_i32_22 = arith.constant 1 : i32
    %82 = tpu.dynamic_rotate %78 by %c1_i32_22 dim 1 : vector<8x256xf32>, i32 -> vector<8x256xf32>
    %c255_i32_23 = arith.constant 255 : i32
    %83 = tpu.dynamic_rotate %78 by %c255_i32_23 dim 1 : vector<8x256xf32>, i32 -> vector<8x256xf32>
    %84 = vector.shape_cast %10 : vector<1x256xi1> to vector<1x256xi1>
    %85 = vector.broadcast %84 : vector<1x256xi1> to vector<8x256xi1>
    %86 = arith.select %85, %83, %82 : vector<8x256xi1>, vector<8x256xf32>
    %87 = vector.shape_cast %12 : vector<1x256xi1> to vector<1x256xi1>
    %88 = vector.broadcast %87 : vector<1x256xi1> to vector<8x256xi1>
    %89 = arith.select %88, %82, %83 : vector<8x256xi1>, vector<8x256xf32>
    %c1_i32_24 = arith.constant 1 : i32
    %90 = tpu.dynamic_rotate %73 by %c1_i32_24 dim 1 : vector<8x256xf32>, i32 -> vector<8x256xf32>
    %c255_i32_25 = arith.constant 255 : i32
    %91 = tpu.dynamic_rotate %73 by %c255_i32_25 dim 1 : vector<8x256xf32>, i32 -> vector<8x256xf32>
    %92 = vector.shape_cast %10 : vector<1x256xi1> to vector<1x256xi1>
    %93 = vector.broadcast %92 : vector<1x256xi1> to vector<8x256xi1>
    %94 = arith.select %93, %91, %90 : vector<8x256xi1>, vector<8x256xf32>
    %95 = vector.shape_cast %12 : vector<1x256xi1> to vector<1x256xi1>
    %96 = vector.broadcast %95 : vector<1x256xi1> to vector<8x256xi1>
    %97 = arith.select %96, %90, %91 : vector<8x256xi1>, vector<8x256xf32>
    %c1_i32_26 = arith.constant 1 : i32
    %98 = tpu.dynamic_rotate %81 by %c1_i32_26 dim 1 : vector<8x256xf32>, i32 -> vector<8x256xf32>
    %c255_i32_27 = arith.constant 255 : i32
    %99 = tpu.dynamic_rotate %81 by %c255_i32_27 dim 1 : vector<8x256xf32>, i32 -> vector<8x256xf32>
    %100 = vector.shape_cast %10 : vector<1x256xi1> to vector<1x256xi1>
    %101 = vector.broadcast %100 : vector<1x256xi1> to vector<8x256xi1>
    %102 = arith.select %101, %99, %98 : vector<8x256xi1>, vector<8x256xf32>
    %103 = vector.shape_cast %12 : vector<1x256xi1> to vector<1x256xi1>
    %104 = vector.broadcast %103 : vector<1x256xi1> to vector<8x256xi1>
    %105 = arith.select %104, %98, %99 : vector<8x256xi1>, vector<8x256xf32>
    %106 = tpu.concatenate %86, %78, %89, %94, %73, %97, %102, %81, %105 in 0 : vector<8x256xf32>, vector<8x256xf32>, vector<8x256xf32>, vector<8x256xf32>, vector<8x256xf32>, vector<8x256xf32>, vector<8x256xf32>, vector<8x256xf32>, vector<8x256xf32> -> vector<72x256xf32>
    %107 = arith.truncf %106 : vector<72x256xf32> to vector<72x256xbf16>
    %cst_28 = arith.constant dense<0.000000e+00> : vector<8x256xf32>
    %108 = tpu.matmul %14, %107, %cst_28 {dimension_numbers = #tpu.dot_dimension_numbers<[1], [0], [0], [1], [0, 0, 1, 1], [], []>} : vector<8x72xbf16>, vector<72x256xbf16>, vector<8x256xf32> -> vector<8x256xf32>
    %cst_29 = arith.constant dense<0.000000e+00> : vector<8xf32>
    %109 = vector.multi_reduction <add>, %108, %cst_29 [1] : vector<8x256xf32> to vector<8xf32>
    %110 = vector.shape_cast %109 : vector<8xf32> to vector<8x1xf32>
    %cst_30 = arith.constant 3.906250e-03 : f32
    %111 = vector.broadcast %cst_30 : f32 to vector<8x1xf32>
    %112 = arith.mulf %110, %111 : vector<8x1xf32>
    %113 = arith.mulf %108, %108 : vector<8x256xf32>
    %cst_31 = arith.constant dense<0.000000e+00> : vector<8xf32>
    %114 = vector.multi_reduction <add>, %113, %cst_31 [1] : vector<8x256xf32> to vector<8xf32>
    %115 = vector.shape_cast %114 : vector<8xf32> to vector<8x1xf32>
    %cst_32 = arith.constant 3.906250e-03 : f32
    %116 = vector.broadcast %cst_32 : f32 to vector<8x1xf32>
    %117 = arith.mulf %115, %116 : vector<8x1xf32>
    %118 = arith.mulf %112, %112 : vector<8x1xf32>
    %119 = arith.subf %117, %118 : vector<8x1xf32>
    %cst_33 = arith.constant 0.000000e+00 : f32
    %120 = vector.broadcast %cst_33 : f32 to vector<8x1xf32>
    %121 = arith.maximumf %119, %120 : vector<8x1xf32>
    %122 = vector.broadcast %112 : vector<8x1xf32> to vector<8x256xf32>
    %123 = arith.subf %108, %122 : vector<8x256xf32>
    %cst_34 = arith.constant 9.99999974E-6 : f32
    %124 = vector.broadcast %cst_34 : f32 to vector<8x1xf32>
    %125 = arith.addf %121, %124 : vector<8x1xf32>
    %126 = math.rsqrt %125 : vector<8x1xf32>
    %127 = vector.broadcast %126 : vector<8x1xf32> to vector<8x256xf32>
    %128 = arith.mulf %123, %127 : vector<8x256xf32>
    %129 = arith.addf %16, %128 : vector<8x256xf32>
    %c0_35 = arith.constant 0 : index
    %c0_36 = arith.constant 0 : index
    %c0_37 = arith.constant 0 : index
    %130 = vector.load %arg4[%c0_35, %c0_36, %c0_37] : memref<2x8x256xf32, #tpu.memory_space<vmem>>, vector<1x8x256xf32>
    %131 = vector.shape_cast %130 : vector<1x8x256xf32> to vector<8x256xf32>
    %132 = vector.shape_cast %129 : vector<8x256xf32> to vector<1x8x256xf32>
    tpu.vector_store %arg4[%c0_35, %c0_36, %c0_37], %132 {strides = array<i32>} : memref<2x8x256xf32, #tpu.memory_space<vmem>>, vector<1x8x256xf32>,
    %c1 = arith.constant 1 : index
    %c0_38 = arith.constant 0 : index
    %c0_39 = arith.constant 0 : index
    %133 = vector.load %arg1[%c1, %c0_38, %c0_39] : memref<2x8x256xf32, #tpu.memory_space<vmem>>, vector<1x8x256xf32>
    %134 = vector.shape_cast %133 : vector<1x8x256xf32> to vector<8x256xf32>
    %c16_i32_40 = arith.constant 16 : i32
    %135 = tpu.dynamic_rotate %134 by %c16_i32_40 dim 1 : vector<8x256xf32>, i32 -> vector<8x256xf32>
    %c240_i32_41 = arith.constant 240 : i32
    %136 = tpu.dynamic_rotate %134 by %c240_i32_41 dim 1 : vector<8x256xf32>, i32 -> vector<8x256xf32>
    %137 = vector.shape_cast %6 : vector<1x256xi1> to vector<1x256xi1>
    %138 = vector.broadcast %137 : vector<1x256xi1> to vector<8x256xi1>
    %139 = arith.select %138, %136, %135 : vector<8x256xi1>, vector<8x256xf32>
    %140 = vector.shape_cast %8 : vector<1x256xi1> to vector<1x256xi1>
    %141 = vector.broadcast %140 : vector<1x256xi1> to vector<8x256xi1>
    %142 = arith.select %141, %135, %136 : vector<8x256xi1>, vector<8x256xf32>
    %c1_i32_42 = arith.constant 1 : i32
    %143 = tpu.dynamic_rotate %139 by %c1_i32_42 dim 1 : vector<8x256xf32>, i32 -> vector<8x256xf32>
    %c255_i32_43 = arith.constant 255 : i32
    %144 = tpu.dynamic_rotate %139 by %c255_i32_43 dim 1 : vector<8x256xf32>, i32 -> vector<8x256xf32>
    %145 = vector.shape_cast %10 : vector<1x256xi1> to vector<1x256xi1>
    %146 = vector.broadcast %145 : vector<1x256xi1> to vector<8x256xi1>
    %147 = arith.select %146, %144, %143 : vector<8x256xi1>, vector<8x256xf32>
    %148 = vector.shape_cast %12 : vector<1x256xi1> to vector<1x256xi1>
    %149 = vector.broadcast %148 : vector<1x256xi1> to vector<8x256xi1>
    %150 = arith.select %149, %143, %144 : vector<8x256xi1>, vector<8x256xf32>
    %c1_i32_44 = arith.constant 1 : i32
    %151 = tpu.dynamic_rotate %134 by %c1_i32_44 dim 1 : vector<8x256xf32>, i32 -> vector<8x256xf32>
    %c255_i32_45 = arith.constant 255 : i32
    %152 = tpu.dynamic_rotate %134 by %c255_i32_45 dim 1 : vector<8x256xf32>, i32 -> vector<8x256xf32>
    %153 = vector.shape_cast %10 : vector<1x256xi1> to vector<1x256xi1>
    %154 = vector.broadcast %153 : vector<1x256xi1> to vector<8x256xi1>
    %155 = arith.select %154, %152, %151 : vector<8x256xi1>, vector<8x256xf32>
    %156 = vector.shape_cast %12 : vector<1x256xi1> to vector<1x256xi1>
    %157 = vector.broadcast %156 : vector<1x256xi1> to vector<8x256xi1>
    %158 = arith.select %157, %151, %152 : vector<8x256xi1>, vector<8x256xf32>
    %c1_i32_46 = arith.constant 1 : i32
    %159 = tpu.dynamic_rotate %142 by %c1_i32_46 dim 1 : vector<8x256xf32>, i32 -> vector<8x256xf32>
    %c255_i32_47 = arith.constant 255 : i32
    %160 = tpu.dynamic_rotate %142 by %c255_i32_47 dim 1 : vector<8x256xf32>, i32 -> vector<8x256xf32>
    %161 = vector.shape_cast %10 : vector<1x256xi1> to vector<1x256xi1>
    %162 = vector.broadcast %161 : vector<1x256xi1> to vector<8x256xi1>
    %163 = arith.select %162, %160, %159 : vector<8x256xi1>, vector<8x256xf32>
    %164 = vector.shape_cast %12 : vector<1x256xi1> to vector<1x256xi1>
    %165 = vector.broadcast %164 : vector<1x256xi1> to vector<8x256xi1>
    %166 = arith.select %165, %159, %160 : vector<8x256xi1>, vector<8x256xf32>
    %167 = tpu.concatenate %147, %139, %150, %155, %134, %158, %163, %142, %166 in 0 : vector<8x256xf32>, vector<8x256xf32>, vector<8x256xf32>, vector<8x256xf32>, vector<8x256xf32>, vector<8x256xf32>, vector<8x256xf32>, vector<8x256xf32>, vector<8x256xf32> -> vector<72x256xf32>
    %168 = arith.truncf %167 : vector<72x256xf32> to vector<72x256xbf16>
    %cst_48 = arith.constant dense<0.000000e+00> : vector<8x256xf32>
    %169 = tpu.matmul %13, %168, %cst_48 {dimension_numbers = #tpu.dot_dimension_numbers<[1], [0], [0], [1], [0, 0, 1, 1], [], []>} : vector<8x72xbf16>, vector<72x256xbf16>, vector<8x256xf32> -> vector<8x256xf32>
    %cst_49 = arith.constant dense<0.000000e+00> : vector<8xf32>
    %170 = vector.multi_reduction <add>, %169, %cst_49 [1] : vector<8x256xf32> to vector<8xf32>
    %171 = vector.shape_cast %170 : vector<8xf32> to vector<8x1xf32>
    %cst_50 = arith.constant 3.906250e-03 : f32
    %172 = vector.broadcast %cst_50 : f32 to vector<8x1xf32>
    %173 = arith.mulf %171, %172 : vector<8x1xf32>
    %174 = arith.mulf %169, %169 : vector<8x256xf32>
    %cst_51 = arith.constant dense<0.000000e+00> : vector<8xf32>
    %175 = vector.multi_reduction <add>, %174, %cst_51 [1] : vector<8x256xf32> to vector<8xf32>
    %176 = vector.shape_cast %175 : vector<8xf32> to vector<8x1xf32>
    %cst_52 = arith.constant 3.906250e-03 : f32
    %177 = vector.broadcast %cst_52 : f32 to vector<8x1xf32>
    %178 = arith.mulf %176, %177 : vector<8x1xf32>
    %179 = arith.mulf %173, %173 : vector<8x1xf32>
    %180 = arith.subf %178, %179 : vector<8x1xf32>
    %cst_53 = arith.constant 0.000000e+00 : f32
    %181 = vector.broadcast %cst_53 : f32 to vector<8x1xf32>
    %182 = arith.maximumf %180, %181 : vector<8x1xf32>
    %183 = vector.broadcast %173 : vector<8x1xf32> to vector<8x256xf32>
    %184 = arith.subf %169, %183 : vector<8x256xf32>
    %cst_54 = arith.constant 9.99999974E-6 : f32
    %185 = vector.broadcast %cst_54 : f32 to vector<8x1xf32>
    %186 = arith.addf %182, %185 : vector<8x1xf32>
    %187 = math.rsqrt %186 : vector<8x1xf32>
    %188 = vector.broadcast %187 : vector<8x1xf32> to vector<8x256xf32>
    %189 = arith.mulf %184, %188 : vector<8x256xf32>
    %cst_55 = arith.constant 0.000000e+00 : f32
    %190 = vector.broadcast %cst_55 : f32 to vector<8x256xf32>
    %191 = arith.maximumf %189, %190 : vector<8x256xf32>
    %c16_i32_56 = arith.constant 16 : i32
    %192 = tpu.dynamic_rotate %191 by %c16_i32_56 dim 1 : vector<8x256xf32>, i32 -> vector<8x256xf32>
    %c240_i32_57 = arith.constant 240 : i32
    %193 = tpu.dynamic_rotate %191 by %c240_i32_57 dim 1 : vector<8x256xf32>, i32 -> vector<8x256xf32>
    %194 = vector.shape_cast %6 : vector<1x256xi1> to vector<1x256xi1>
    %195 = vector.broadcast %194 : vector<1x256xi1> to vector<8x256xi1>
    %196 = arith.select %195, %193, %192 : vector<8x256xi1>, vector<8x256xf32>
    %197 = vector.shape_cast %8 : vector<1x256xi1> to vector<1x256xi1>
    %198 = vector.broadcast %197 : vector<1x256xi1> to vector<8x256xi1>
    %199 = arith.select %198, %192, %193 : vector<8x256xi1>, vector<8x256xf32>
    %c1_i32_58 = arith.constant 1 : i32
    %200 = tpu.dynamic_rotate %196 by %c1_i32_58 dim 1 : vector<8x256xf32>, i32 -> vector<8x256xf32>
    %c255_i32_59 = arith.constant 255 : i32
    %201 = tpu.dynamic_rotate %196 by %c255_i32_59 dim 1 : vector<8x256xf32>, i32 -> vector<8x256xf32>
    %202 = vector.shape_cast %10 : vector<1x256xi1> to vector<1x256xi1>
    %203 = vector.broadcast %202 : vector<1x256xi1> to vector<8x256xi1>
    %204 = arith.select %203, %201, %200 : vector<8x256xi1>, vector<8x256xf32>
    %205 = vector.shape_cast %12 : vector<1x256xi1> to vector<1x256xi1>
    %206 = vector.broadcast %205 : vector<1x256xi1> to vector<8x256xi1>
    %207 = arith.select %206, %200, %201 : vector<8x256xi1>, vector<8x256xf32>
    %c1_i32_60 = arith.constant 1 : i32
    %208 = tpu.dynamic_rotate %191 by %c1_i32_60 dim 1 : vector<8x256xf32>, i32 -> vector<8x256xf32>
    %c255_i32_61 = arith.constant 255 : i32
    %209 = tpu.dynamic_rotate %191 by %c255_i32_61 dim 1 : vector<8x256xf32>, i32 -> vector<8x256xf32>
    %210 = vector.shape_cast %10 : vector<1x256xi1> to vector<1x256xi1>
    %211 = vector.broadcast %210 : vector<1x256xi1> to vector<8x256xi1>
    %212 = arith.select %211, %209, %208 : vector<8x256xi1>, vector<8x256xf32>
    %213 = vector.shape_cast %12 : vector<1x256xi1> to vector<1x256xi1>
    %214 = vector.broadcast %213 : vector<1x256xi1> to vector<8x256xi1>
    %215 = arith.select %214, %208, %209 : vector<8x256xi1>, vector<8x256xf32>
    %c1_i32_62 = arith.constant 1 : i32
    %216 = tpu.dynamic_rotate %199 by %c1_i32_62 dim 1 : vector<8x256xf32>, i32 -> vector<8x256xf32>
    %c255_i32_63 = arith.constant 255 : i32
    %217 = tpu.dynamic_rotate %199 by %c255_i32_63 dim 1 : vector<8x256xf32>, i32 -> vector<8x256xf32>
    %218 = vector.shape_cast %10 : vector<1x256xi1> to vector<1x256xi1>
    %219 = vector.broadcast %218 : vector<1x256xi1> to vector<8x256xi1>
    %220 = arith.select %219, %217, %216 : vector<8x256xi1>, vector<8x256xf32>
    %221 = vector.shape_cast %12 : vector<1x256xi1> to vector<1x256xi1>
    %222 = vector.broadcast %221 : vector<1x256xi1> to vector<8x256xi1>
    %223 = arith.select %222, %216, %217 : vector<8x256xi1>, vector<8x256xf32>
    %224 = tpu.concatenate %204, %196, %207, %212, %191, %215, %220, %199, %223 in 0 : vector<8x256xf32>, vector<8x256xf32>, vector<8x256xf32>, vector<8x256xf32>, vector<8x256xf32>, vector<8x256xf32>, vector<8x256xf32>, vector<8x256xf32>, vector<8x256xf32> -> vector<72x256xf32>
    %225 = arith.truncf %224 : vector<72x256xf32> to vector<72x256xbf16>
    %cst_64 = arith.constant dense<0.000000e+00> : vector<8x256xf32>
    %226 = tpu.matmul %14, %225, %cst_64 {dimension_numbers = #tpu.dot_dimension_numbers<[1], [0], [0], [1], [0, 0, 1, 1], [], []>} : vector<8x72xbf16>, vector<72x256xbf16>, vector<8x256xf32> -> vector<8x256xf32>
    %cst_65 = arith.constant dense<0.000000e+00> : vector<8xf32>
    %227 = vector.multi_reduction <add>, %226, %cst_65 [1] : vector<8x256xf32> to vector<8xf32>
    %228 = vector.shape_cast %227 : vector<8xf32> to vector<8x1xf32>
    %cst_66 = arith.constant 3.906250e-03 : f32
    %229 = vector.broadcast %cst_66 : f32 to vector<8x1xf32>
    %230 = arith.mulf %228, %229 : vector<8x1xf32>
    %231 = arith.mulf %226, %226 : vector<8x256xf32>
    %cst_67 = arith.constant dense<0.000000e+00> : vector<8xf32>
    %232 = vector.multi_reduction <add>, %231, %cst_67 [1] : vector<8x256xf32> to vector<8xf32>
    %233 = vector.shape_cast %232 : vector<8xf32> to vector<8x1xf32>
    %cst_68 = arith.constant 3.906250e-03 : f32
    %234 = vector.broadcast %cst_68 : f32 to vector<8x1xf32>
    %235 = arith.mulf %233, %234 : vector<8x1xf32>
    %236 = arith.mulf %230, %230 : vector<8x1xf32>
    %237 = arith.subf %235, %236 : vector<8x1xf32>
    %cst_69 = arith.constant 0.000000e+00 : f32
    %238 = vector.broadcast %cst_69 : f32 to vector<8x1xf32>
    %239 = arith.maximumf %237, %238 : vector<8x1xf32>
    %240 = vector.broadcast %230 : vector<8x1xf32> to vector<8x256xf32>
    %241 = arith.subf %226, %240 : vector<8x256xf32>
    %cst_70 = arith.constant 9.99999974E-6 : f32
    %242 = vector.broadcast %cst_70 : f32 to vector<8x1xf32>
    %243 = arith.addf %239, %242 : vector<8x1xf32>
    %244 = math.rsqrt %243 : vector<8x1xf32>
    %245 = vector.broadcast %244 : vector<8x1xf32> to vector<8x256xf32>
    %246 = arith.mulf %241, %245 : vector<8x256xf32>
    %247 = arith.addf %134, %246 : vector<8x256xf32>
    %c1_71 = arith.constant 1 : index
    %c0_72 = arith.constant 0 : index
    %c0_73 = arith.constant 0 : index
    %248 = vector.load %arg4[%c1_71, %c0_72, %c0_73] : memref<2x8x256xf32, #tpu.memory_space<vmem>>, vector<1x8x256xf32>
    %249 = vector.shape_cast %248 : vector<1x8x256xf32> to vector<8x256xf32>
    %250 = vector.shape_cast %247 : vector<8x256xf32> to vector<1x8x256xf32>
    tpu.vector_store %arg4[%c1_71, %c0_72, %c0_73], %250 {strides = array<i32>} : memref<2x8x256xf32, #tpu.memory_space<vmem>>, vector<1x8x256xf32>,
    return
  }
  func.func @transform_0(%arg0: i32) -> (i32, i32, i32) {
    %c0_i32 = arith.constant 0 : i32
    %c0_i32_0 = arith.constant 0 : i32
    %c0_i32_1 = arith.constant 0 : i32
    return %arg0, %c0_i32, %c0_i32_0 : i32, i32, i32
  }
  func.func @transform_1(%arg0: i32) -> (i32, i32) {
    %c0_i32 = arith.constant 0 : i32
    %c0_i32_0 = arith.constant 0 : i32
    %c0_i32_1 = arith.constant 0 : i32
    return %c0_i32, %c0_i32_0 : i32, i32
  }
  func.func @transform_2(%arg0: i32) -> (i32, i32) {
    %c0_i32 = arith.constant 0 : i32
    %c0_i32_0 = arith.constant 0 : i32
    %c0_i32_1 = arith.constant 0 : i32
    return %c0_i32, %c0_i32_0 : i32, i32
  }
  func.func @transform_3(%arg0: i32) -> (i32, i32, i32) {
    %c0_i32 = arith.constant 0 : i32
    %c0_i32_0 = arith.constant 0 : i32
    %c0_i32_1 = arith.constant 0 : i32
    return %arg0, %c0_i32, %c0_i32_0 : i32, i32, i32
  }
}

</mosaic_0001>

<llo_original>
// kernel: tpu_custom_call.1
$region0: #{tpu_custom_call.1}
  #allocation0 [shape = 'u32[]', space=smem, size = 0x4, offset = 0x4, fixed_abs, tag = 'smem constant byte address 0x4 - core index']
  #allocation1 [shape = 'u32[72,128]{1,0:T(1,128)}', space=vmem, size = 0x9000, scoped, tag = 'internal scratch']
  %s0 = inlined_call_operand.hbm [shape: f32[4,8,256], index: 0, kind: input, shape index: {}]
  %s1 = inlined_call_operand.hbm [shape: bf16[8,72], index: 1, kind: input, shape index: {}]
  %s2 = inlined_call_operand.hbm [shape: bf16[8,72], index: 2, kind: input, shape index: {}]
  %s3 = inlined_call_operand.hbm [shape: f32[4,8,256], index: 3, kind: output, shape index: {}]
  %s4 = sld [smem:[#allocation0]]
  $region57: #{tpu_custom_call.1} parent=0
    _
  %s6 = ssub.s32 1, %s4
  %s7 = scalar_select 0, %s6, %s4
  $region1: #{tpu_custom_call.1} parent=0
    #allocation2 [shape = 'u8[32768]{0}', space=vmem, size = 0x8000, scoped, tag = 'input window, operand 0']
    #allocation3 [shape = 's32[2]{0}', space=sflag, size = 0x8, scoped, tag = 'scoped memory for tpu_custom_call.1']
    #allocation4 [shape = 's32[2]{0}', space=sflag, size = 0x8, scoped, tag = 'scoped memory for tpu_custom_call.1']
    #allocation5 [shape = 'u8[2048]{0}', space=vmem, size = 0x800, scoped, tag = 'input window, operand 1, single buffered']
    #allocation6 [shape = 's32[1]{0}', space=sflag, size = 0x4, scoped, tag = 'scoped memory for tpu_custom_call.1']
    #allocation7 [shape = 'u8[2048]{0}', space=vmem, size = 0x800, scoped, tag = 'input window, operand 2, single buffered']
    #allocation8 [shape = 'u8[32768]{0}', space=vmem, size = 0x8000, scoped, tag = 'output window, operand 0']
    %8 = vsyncpa [#allocation3], 0
    %s9 = scalar_lea.sflag [#allocation3], 1
    %10 = vsyncpa %s9, 0
    %11 = vsyncpa [#allocation6], 0
    %12 = vsyncpa [#allocation4], 0
    %s13 = scalar_lea.sflag [#allocation4], 1
    %14 = vsyncpa %s13, 0
    loop: start=0, step=1, limit=4
    $region2: #{tpu_custom_call.1} parent=1 // loop_pre_header
      _
    $region3: #{tpu_custom_call.1} parent=1 // loop_header
      %s16 = sphi 0, %s20
      %p17 = scmp.ge.s32.totalorder %s16, 4
      %s26 = sphi 0, %s28
      %s29 = sphi 0, %s26
      %s30 = sphi 0, %s29
      %s46 = sphi 0, %s30
      %s50 = sphi 0, %s50
      %s52 = sphi 0, %s50
      %s53 = sphi 0, %s52
      %s67 = sphi 0, %s53
      %s71 = sphi 0, %s71
      %s73 = sphi 0, %s71
      %s74 = sphi 0, %s73
      %s88 = sphi 0, %s74
      %s94 = sphi 0, %s96
      %s97 = sphi 0, %s94
      %s98 = sphi 0, %s97
      %s114 = sphi 0, %s98
    $region4: #{tpu_custom_call.1} parent=1 // loop_header_branch
      %19 = sbr.rel (%p17) target = $region8
    $region5: #{tpu_custom_call.1} parent=1 // loop_body
      %s21 = ssub.s32 %s16, 1
      %s22 = ssub.s32 %s16, 2
      %s23 = sadd.s32 %s16, 1
      %s24 = ssub.s32 %s16, %s23
      %p25 = scmp.eq.s32.totalorder %s24, 0
      %s27 = sadd.s32 %s26, 1
      %s28 = scalar_select %p25, %s26, %s27
      %p31 = pneg %p25
      %p32 = scmp.eq.s32.totalorder %s16, 1
      %p33 = por %p31, %p32
      %p34 = scmp.ne.s32.totalorder %s26, %s29
      %p35 = scmp.eq.s32.totalorder %s16, 0
      %p36 = por %p34, %p35
      %p37 = scmp.ne.s32.totalorder %s26, %s29
      %p38 = scmp.eq.s32.totalorder %s21, 1
      %p39 = por %p37, %p38
      %p40 = scmp.ne.s32.totalorder %s29, %s30
      %p41 = scmp.eq.s32.totalorder %s21, 0
      %p42 = por %p40, %p41
      %p43 = scmp.ne.s32.totalorder %s29, %s30
      %p44 = scmp.eq.s32.totalorder %s22, 1
      %p45 = por %p43, %p44
      %p47 = scmp.ne.s32.totalorder %s30, %s46
      %p48 = scmp.eq.s32.totalorder %s22, 0
      %p49 = por %p47, %p48
      %s51 = sadd.s32 %s50, 1
      %p54 = scmp.eq.s32.totalorder %s16, 1
      %p55 = scmp.ne.s32.totalorder %s50, %s52
      %p56 = scmp.eq.s32.totalorder %s16, 0
      %p57 = por %p55, %p56
      %p58 = scmp.ne.s32.totalorder %s50, %s52
      %p59 = scmp.eq.s32.totalorder %s21, 1
      %p60 = por %p58, %p59
      %p61 = scmp.ne.s32.totalorder %s52, %s53
      %p62 = scmp.eq.s32.totalorder %s21, 0
      %p63 = por %p61, %p62
      %p64 = scmp.ne.s32.totalorder %s52, %s53
      %p65 = scmp.eq.s32.totalorder %s22, 1
      %p66 = por %p64, %p65
      %p68 = scmp.ne.s32.totalorder %s53, %s67
      %p69 = scmp.eq.s32.totalorder %s22, 0
      %p70 = por %p68, %p69
      %s72 = sadd.s32 %s71, 1
      %p75 = scmp.eq.s32.totalorder %s16, 1
      %p76 = scmp.ne.s32.totalorder %s71, %s73
      %p77 = scmp.eq.s32.totalorder %s16, 0
      %p78 = por %p76, %p77
      %p79 = scmp.ne.s32.totalorder %s71, %s73
      %p80 = scmp.eq.s32.totalorder %s21, 1
      %p81 = por %p79, %p80
      %p82 = scmp.ne.s32.totalorder %s73, %s74
      %p83 = scmp.eq.s32.totalorder %s21, 0
      %p84 = por %p82, %p83
      %p85 = scmp.ne.s32.totalorder %s73, %s74
      %p86 = scmp.eq.s32.totalorder %s22, 1
      %p87 = por %p85, %p86
      %p89 = scmp.ne.s32.totalorder %s74, %s88
      %p90 = scmp.eq.s32.totalorder %s22, 0
      %p91 = por %p89, %p90
      %s92 = ssub.s32 %s16, %s23
      %p93 = scmp.eq.s32.totalorder %s92, 0
      %s95 = sadd.s32 %s94, 1
      %s96 = scalar_select %p93, %s94, %s95
      %p99 = pneg %p93
      %p100 = scmp.eq.s32.totalorder %s16, 1
      %p101 = por %p99, %p100
      %p102 = scmp.ne.s32.totalorder %s94, %s97
      %p103 = scmp.eq.s32.totalorder %s16, 0
      %p104 = por %p102, %p103
      %p105 = scmp.ne.s32.totalorder %s94, %s97
      %p106 = scmp.eq.s32.totalorder %s21, 1
      %p107 = por %p105, %p106
      %p108 = scmp.ne.s32.totalorder %s97, %s98
      %p109 = scmp.eq.s32.totalorder %s21, 0
      %p110 = por %p108, %p109
      %p111 = scmp.ne.s32.totalorder %s97, %s98
      %p112 = scmp.eq.s32.totalorder %s22, 1
      %p113 = por %p111, %p112
      %p115 = scmp.ne.s32.totalorder %s98, %s114
      %p116 = scmp.eq.s32.totalorder %s22, 0
      %p117 = por %p115, %p116
      %p118 = scmp.le.s32.totalorder 1, %s16
      %p119 = scmp.lt.s32.totalorder %s16, 3
      %p120 = pnand %p118, %p119
      %p121 = pneg %p120
      // Predicated region
      $region9: #{tpu_custom_call.1} parent=5 // pred_check
        _
      $region10: #{tpu_custom_call.1} parent=5 // pred_check_branch
        %123 = sbr.rel (%p120) target = $region12
      $region11: #{tpu_custom_call.1} parent=5 // pred_region
        %s124 = ssub.s32 %s16, 1
        // Predicated region
        $region13: #{tpu_custom_call.1} parent=11 // pred_check
          %p125 = pneg %p63
        $region14: #{tpu_custom_call.1} parent=11 // pred_check_branch
          %127 = sbr.rel (%p125) target = $region16
        $region15: #{tpu_custom_call.1} parent=11 // pred_region
          %129 = vsyncadd [#allocation6], 0
          %s131 = sshll.u32 %s1, 4
          %s132 = int_to_ptr.hbm [resolvable:$true] %s131
          %s133 = sshll.u32 [#allocation5], 4
          %s134 = int_to_ptr.vmem [resolvable:$true] %s133
          %136 = dma.hbm_to_vmem [thread:$0]  %s132, 64, %s134, [#allocation6]
        $region16: #{tpu_custom_call.1} parent=11 // pred_fallthru
          _
        // Predicated region
        $region17: #{tpu_custom_call.1} parent=11 // pred_check
          %p137 = pneg %p84
        $region18: #{tpu_custom_call.1} parent=11 // pred_check_branch
          %139 = sbr.rel (%p137) target = $region20
        $region19: #{tpu_custom_call.1} parent=11 // pred_region
          %141 = vsyncadd [#allocation6], 0
          %s143 = sshll.u32 %s2, 4
          %s144 = int_to_ptr.hbm [resolvable:$true] %s143
          %s145 = sshll.u32 [#allocation7], 4
          %s146 = int_to_ptr.vmem [resolvable:$true] %s145
          %148 = dma.hbm_to_vmem [thread:$0]  %s144, 64, %s146, [#allocation6]
        $region20: #{tpu_custom_call.1} parent=11 // pred_fallthru
          _
      $region12: #{tpu_custom_call.1} parent=5 // pred_fallthru
        _
      %p149 = scmp.lt.s32.totalorder %s16, 2
      // Predicated region
      $region21: #{tpu_custom_call.1} parent=5 // pred_check
        %p150 = pneg %p149
      $region22: #{tpu_custom_call.1} parent=5 // pred_check_branch
        %152 = sbr.rel (%p150) target = $region24
      $region23: #{tpu_custom_call.1} parent=5 // pred_region
        // Predicated region
        $region25: #{tpu_custom_call.1} parent=23 // pred_check
          %p153 = pneg %p36
        $region26: #{tpu_custom_call.1} parent=23 // pred_check_branch
          %155 = sbr.rel (%p153) target = $region28
        $region27: #{tpu_custom_call.1} parent=23 // pred_region
          %s156 = sand.u32 %s26, 1
          %s157 = scalar_lea.sflag [#allocation3], %s156
          %s158 = sand.u32 %s26, 1
          %s159 = smul.addr %s158, 32
          %s160 = scalar_lea.vmem [#allocation2], %s159
          %s161 = smul.u32 2, %s16
          %163 = vsyncadd %s157, 0
          %s164 = smul.addr %s161, 2
          %s165 = smul.addr %s164, 8
          %s166 = scalar_lea.hbm %s0, %s165
          %s167 = sshll.u32 %s166, 4
          %s168 = int_to_ptr.hbm [resolvable:$true] %s167
          %s169 = sshll.u32 %s160, 4
          %s170 = int_to_ptr.vmem [resolvable:$true] %s169
          %175 = dma.hbm_to_vmem [thread:$0]  %s168, 512, %s170, %s157, 256, 256, 16
        $region28: #{tpu_custom_call.1} parent=23 // pred_fallthru
          _
      $region24: #{tpu_custom_call.1} parent=5 // pred_fallthru
        _
      %p176 = scmp.le.s32.totalorder 1, %s16
      %p177 = scmp.lt.s32.totalorder %s16, 3
      %p178 = pnand %p176, %p177
      %p179 = pneg %p178
      // Predicated region
      $region29: #{tpu_custom_call.1} parent=5 // pred_check
        _
      $region30: #{tpu_custom_call.1} parent=5 // pred_check_branch
        %181 = sbr.rel (%p178) target = $region32
      $region31: #{tpu_custom_call.1} parent=5 // pred_region
        %s182 = ssub.s32 %s16, 1
        %s183 = sand.u32 %s29, 1
        %s184 = scalar_lea.sflag [#allocation3], %s183
        %s185 = sand.u32 %s29, 1
        %s186 = smul.addr %s185, 32
        %s187 = scalar_lea.vmem [#allocation2], %s186
        // Predicated region
        $region33: #{tpu_custom_call.1} parent=31 // pred_check
          %p188 = pneg %p42
        $region34: #{tpu_custom_call.1} parent=31 // pred_check_branch
          %190 = sbr.rel (%p188) target = $region36
        $region35: #{tpu_custom_call.1} parent=31 // pred_region
          %192 = dma.done %s184, 512
        $region36: #{tpu_custom_call.1} parent=31 // pred_fallthru
          _
        // Predicated region
        $region37: #{tpu_custom_call.1} parent=31 // pred_check
          %p193 = pneg %p63
        $region38: #{tpu_custom_call.1} parent=31 // pred_check_branch
          %195 = sbr.rel (%p193) target = $region40
        $region39: #{tpu_custom_call.1} parent=31 // pred_region
          %197 = dma.done [#allocation6], 64
        $region40: #{tpu_custom_call.1} parent=31 // pred_fallthru
          _
        // Predicated region
        $region41: #{tpu_custom_call.1} parent=31 // pred_check
          %p198 = pneg %p84
        $region42: #{tpu_custom_call.1} parent=31 // pred_check_branch
          %200 = sbr.rel (%p198) target = $region44
        $region43: #{tpu_custom_call.1} parent=31 // pred_region
          %202 = dma.done [#allocation6], 64
        $region44: #{tpu_custom_call.1} parent=31 // pred_fallthru
          _
        %s203 = sand.u32 %s29, 1
        %s204 = scalar_lea.sflag [#allocation3], %s203
        %s205 = sand.u32 %s29, 1
        %s206 = smul.addr %s205, 32
        %s207 = scalar_lea.vmem [#allocation2], %s206
        %p208 = pneg %p42
        %p209 = pneg %p39
        %p210 = pneg %p63
        %p211 = pneg %p60
        %p212 = pneg %p84
        %p213 = pneg %p81
        %p214 = pneg %p110
        %p215 = pneg %p107
        %s216 = sand.u32 %s97, 1
        %s217 = scalar_lea.sflag [#allocation4], %s216
        %s218 = sand.u32 %s97, 1
        %s219 = smul.addr %s218, 32
        %s220 = scalar_lea.vmem [#allocation8], %s219
        %s221 = smul.u32 2, %s21
        %s222 = smul.u32 2, %s21
        %v224 = vlaneseq
        %v225 = vand.u32 %v224, 127
        %v226 = vadd.s32 %v225, 128
        %v227 = vand.u32 %v225, 15
        %v228 = vand.u32 %v226, 15
        %v229 = vshra.s32 %v225, 4
        %v230 = vshra.s32 %v226, 4
        %vm231 = vcmp.eq.s32.totalorder %v229, 0
        %vm232 = vcmp.eq.s32.totalorder %v230, 0
        %vm233 = vcmp.eq.s32.totalorder %v229, 15
        %vm234 = vcmp.eq.s32.totalorder %v230, 15
        %vm235 = vcmp.eq.s32.totalorder %v227, 0
        %vm236 = vcmp.eq.s32.totalorder %v228, 0
        %vm237 = vcmp.eq.s32.totalorder %v227, 15
        %vm238 = vcmp.eq.s32.totalorder %v228, 15
        %v239 = vld [vmem:[#allocation5] sm:$0xf]
        %v240 = vld [vmem:[#allocation7] sm:$0xf]
        %v241 = vld [vmem:[%s187] sm:$0xff]
        %v242 = vld [vmem:[%s187 + $0x8] sm:$0xff]
        %243 = vrot.lane.b32.xlu0 %v241, 16
        %v244 = vpop.permute.xlu0 %243
        %245 = vrot.lane.b32.xlu0 %v242, 16
        %v246 = vpop.permute.xlu0 %245
        %vm247 = vcmp.lt.s32.totalorder %v225, 16
        %v248 = vsel %vm247, %v244, %v246
        %v249 = vsel %vm247, %v246, %v244
        %250 = vrot.lane.b32.xlu0 %v241, 112
        %v251 = vpop.permute.xlu0 %250
        %252 = vrot.lane.b32.xlu0 %v242, 112
        %v253 = vpop.permute.xlu0 %252
        %vm254 = vcmp.lt.s32.totalorder %v225, 112
        %v255 = vsel %vm254, %v251, %v253
        %v256 = vsel %vm254, %v253, %v251
        %v257 = vsel %vm231, 1, 0
        %v258 = vsel %vm232, 1, 0
        %vm259 = vcmp.eq.s32.totalorder %v257, 1
        %vm260 = vcmp.eq.s32.totalorder %v258, 1
        %v261 = vsel %vm259, %v255, %v249
        %v262 = vsel %vm260, %v256, %v248
        %v263 = vsel %vm233, 1, 0
        %v264 = vsel %vm234, 1, 0
        %vm265 = vcmp.eq.s32.totalorder %v263, 1
        %vm266 = vcmp.eq.s32.totalorder %v264, 1
        %v267 = vsel %vm265, %v249, %v255
        %v268 = vsel %vm266, %v248, %v256
        %269 = vrot.lane.b32.xlu0 %v261, 1
        %v270 = vpop.permute.xlu0 %269
        %271 = vrot.lane.b32.xlu0 %v262, 1
        %v272 = vpop.permute.xlu0 %271
        %vm273 = vcmp.lt.s32.totalorder %v225, 1
        %v274 = vsel %vm273, %v270, %v272
        %v275 = vsel %vm273, %v272, %v270
        %276 = vrot.lane.b32.xlu0 %v261, 127
        %v277 = vpop.permute.xlu0 %276
        %278 = vrot.lane.b32.xlu0 %v262, 127
        %v279 = vpop.permute.xlu0 %278
        %vm280 = vcmp.lt.s32.totalorder %v225, 127
        %v281 = vsel %vm280, %v277, %v279
        %v282 = vsel %vm280, %v279, %v277
        %v283 = vsel %vm235, 1, 0
        %v284 = vsel %vm236, 1, 0
        %vm285 = vcmp.eq.s32.totalorder %v283, 1
        %vm286 = vcmp.eq.s32.totalorder %v284, 1
        %v287 = vsel %vm285, %v281, %v275
        %v288 = vsel %vm286, %v282, %v274
        %v289 = vsel %vm237, 1, 0
        %v290 = vsel %vm238, 1, 0
        %vm291 = vcmp.eq.s32.totalorder %v289, 1
        %vm292 = vcmp.eq.s32.totalorder %v290, 1
        %v293 = vsel %vm291, %v275, %v281
        %v294 = vsel %vm292, %v274, %v282
        %295 = vrot.lane.b32.xlu0 %v241, 1
        %v296 = vpop.permute.xlu0 %295
        %297 = vrot.lane.b32.xlu0 %v242, 1
        %v298 = vpop.permute.xlu0 %297
        %v299 = vsel %vm273, %v296, %v298
        %v300 = vsel %vm273, %v298, %v296
        %301 = vrot.lane.b32.xlu0 %v241, 127
        %v302 = vpop.permute.xlu0 %301
        %303 = vrot.lane.b32.xlu0 %v242, 127
        %v304 = vpop.permute.xlu0 %303
        %v305 = vsel %vm280, %v302, %v304
        %v306 = vsel %vm280, %v304, %v302
        %v307 = vsel %vm285, %v305, %v300
        %v308 = vsel %vm286, %v306, %v299
        %v309 = vsel %vm291, %v300, %v305
        %v310 = vsel %vm292, %v299, %v306
        %311 = vrot.lane.b32.xlu0 %v267, 1
        %v312 = vpop.permute.xlu0 %311
        %313 = vrot.lane.b32.xlu0 %v268, 1
        %v314 = vpop.permute.xlu0 %313
        %v315 = vsel %vm273, %v312, %v314
        %v316 = vsel %vm273, %v314, %v312
        %317 = vrot.lane.b32.xlu0 %v267, 127
        %v318 = vpop.permute.xlu0 %317
        %319 = vrot.lane.b32.xlu0 %v268, 127
        %v320 = vpop.permute.xlu0 %319
        %v321 = vsel %vm280, %v318, %v320
        %v322 = vsel %vm280, %v320, %v318
        %v323 = vsel %vm285, %v321, %v316
        %v324 = vsel %vm286, %v322, %v315
        %v325 = vsel %vm291, %v316, %v321
        %v326 = vsel %vm292, %v315, %v322
        %v327 = vpack.c.bf16 %v261, %v287
        %v328 = vpack.c.bf16 %v262, %v288
        %v329 = vpack.c.bf16 %v307, %v293
        %v330 = vpack.c.bf16 %v308, %v294
        %v331 = vpack.c.bf16 %v309, %v241
        %v332 = vpack.c.bf16 %v310, %v242
        %v333 = vpack.c.bf16 %v267, %v323
        %v334 = vpack.c.bf16 %v268, %v324
        %v335 = vpack.c.bf16 %v325, %v325
        %v336 = vpack.c.bf16 %v326, %v326
        %vm337 = vcmask 588800
        %v339 = vsel %vm337, %v239, 0
        %vm341 = vcmask 1043456
        %v343 = vsel %vm341, %v335, 0
        %v346 = vsel %vm341, %v336, 0
        %348 = vmatpush.bf16.msra.mxu0 0
        %349 = vmatpush.bf16.msra.mxu0 0
        %350 = vmatpush.bf16.msra.mxu0 0
        %351 = vmatpush.bf16.msra.mxu0 %v343
        %352 = vmatpush.bf16.msra.mxu0 %v333
        %353 = vmatpush.bf16.msra.mxu0 %v331
        %354 = vmatpush.bf16.msra.mxu0 %v329
        %355 = vmatpush.bf16.msra.mxu0 %v327
        %356 = vmatmul.bf16.gmra.mxu0 %v339
        %v357 = vpop.f32.mrf.mxu0
        %v358 = vadd.f32 0.0, %v357
        %v359 = vpop.f32.mrf.mxu0
        %360 = vdwg.mxu0
        %361 = vmatpush.bf16.msra.mxu0 0
        %362 = vmatpush.bf16.msra.mxu0 0
        %363 = vmatpush.bf16.msra.mxu0 0
        %364 = vmatpush.bf16.msra.mxu0 %v346
        %365 = vmatpush.bf16.msra.mxu0 %v334
        %366 = vmatpush.bf16.msra.mxu0 %v332
        %367 = vmatpush.bf16.msra.mxu0 %v330
        %368 = vmatpush.bf16.msra.mxu0 %v328
        %369 = vmatmul.bf16.gmra.mxu0 %v339
        %v370 = vpop.f32.mrf.mxu0
        %v371 = vadd.f32 0.0, %v370
        %v372 = vpop.f32.mrf.mxu0
        %373 = vdwg.mxu0
        %v374 = vadd.f32 %v358, %v371
        %375 = vadd.xlane.f32.xlu0 %v374
        %v376 = vpop.xlane.xlu0 %375
        %v377 = vmul.f32 %v376, 0.00390625
        %v378 = vmul.f32 %v358, %v358
        %v379 = vmul.f32 %v371, %v371
        %v380 = vadd.f32 %v378, %v379
        %381 = vadd.xlane.f32.xlu0 %v380
        %v382 = vpop.xlane.xlu0 %381
        %v383 = vmul.f32 %v382, 0.00390625
        %v384 = vmul.f32 %v377, %v377
        %v385 = vsub.f32 %v383, %v384
        %v386 = vmax.f32 %v385, 0.0
        %v387 = vsub.f32 %v358, %v377
        %v388 = vsub.f32 %v371, %v377
        %v389 = vadd.f32 %v386, 1e-05
        %v390 = vrsqrt.pop %v389
        %v391 = vmul.f32 %v390, %v389
        %v392 = vmul.f32 %v391, %v390
        %v393 = vmul.f32 0.5, %v392
        %v394 = vsub.f32 1.5, %v393
        %v395 = vmul.f32 %v390, %v394
        %vm396 = vweird.f32 %v389
        %vm397 = vweird.f32 %v390
        %vm398 = vmor %vm396, %vm397
        %v399 = vsel %vm398, %v390, %v395
        %v400 = vmul.f32 %v387, %v399
        %v401 = vmul.f32 %v388, %v399
        %v402 = vmax.f32 %v400, 0.0
        %v403 = vmax.f32 %v401, 0.0
        %404 = vrot.lane.b32.xlu0 %v402, 16
        %v405 = vpop.permute.xlu0 %404
        %406 = vrot.lane.b32.xlu0 %v403, 16
        %v407 = vpop.permute.xlu0 %406
        %v408 = vsel %vm247, %v405, %v407
        %v409 = vsel %vm247, %v407, %v405
        %410 = vrot.lane.b32.xlu0 %v402, 112
        %v411 = vpop.permute.xlu0 %410
        %412 = vrot.lane.b32.xlu0 %v403, 112
        %v413 = vpop.permute.xlu0 %412
        %v414 = vsel %vm254, %v411, %v413
        %v415 = vsel %vm254, %v413, %v411
        %v416 = vsel %vm259, %v414, %v409
        %v417 = vsel %vm260, %v415, %v408
        %v418 = vsel %vm265, %v409, %v414
        %v419 = vsel %vm266, %v408, %v415
        %420 = vrot.lane.b32.xlu0 %v416, 1
        %v421 = vpop.permute.xlu0 %420
        %422 = vrot.lane.b32.xlu0 %v417, 1
        %v423 = vpop.permute.xlu0 %422
        %v424 = vsel %vm273, %v421, %v423
        %v425 = vsel %vm273, %v423, %v421
        %426 = vrot.lane.b32.xlu0 %v416, 127
        %v427 = vpop.permute.xlu0 %426
        %428 = vrot.lane.b32.xlu0 %v417, 127
        %v429 = vpop.permute.xlu0 %428
        %v430 = vsel %vm280, %v427, %v429
        %v431 = vsel %vm280, %v429, %v427
        %v432 = vsel %vm285, %v430, %v425
        %v433 = vsel %vm286, %v431, %v424
        %v434 = vsel %vm291, %v425, %v430
        %v435 = vsel %vm292, %v424, %v431
        %436 = vrot.lane.b32.xlu0 %v402, 1
        %v437 = vpop.permute.xlu0 %436
        %438 = vrot.lane.b32.xlu0 %v403, 1
        %v439 = vpop.permute.xlu0 %438
        %v440 = vsel %vm273, %v437, %v439
        %v441 = vsel %vm273, %v439, %v437
        %442 = vrot.lane.b32.xlu0 %v402, 127
        %v443 = vpop.permute.xlu0 %442
        %444 = vrot.lane.b32.xlu0 %v403, 127
        %v445 = vpop.permute.xlu0 %444
        %v446 = vsel %vm280, %v443, %v445
        %v447 = vsel %vm280, %v445, %v443
        %v448 = vsel %vm285, %v446, %v441
        %v449 = vsel %vm286, %v447, %v440
        %v450 = vsel %vm291, %v441, %v446
        %v451 = vsel %vm292, %v440, %v447
        %452 = vrot.lane.b32.xlu0 %v418, 1
        %v453 = vpop.permute.xlu0 %452
        %454 = vrot.lane.b32.xlu0 %v419, 1
        %v455 = vpop.permute.xlu0 %454
        %v456 = vsel %vm273, %v453, %v455
        %v457 = vsel %vm273, %v455, %v453
        %458 = vrot.lane.b32.xlu0 %v418, 127
        %v459 = vpop.permute.xlu0 %458
        %460 = vrot.lane.b32.xlu0 %v419, 127
        %v461 = vpop.permute.xlu0 %460
        %v462 = vsel %vm280, %v459, %v461
        %v463 = vsel %vm280, %v461, %v459
        %v464 = vsel %vm285, %v462, %v457
        %v465 = vsel %vm286, %v463, %v456
        %v466 = vsel %vm291, %v457, %v462
        %v467 = vsel %vm292, %v456, %v463
        %v468 = vpack.c.bf16 %v416, %v432
        %v469 = vpack.c.bf16 %v417, %v433
        %v470 = vpack.c.bf16 %v448, %v434
        %v471 = vpack.c.bf16 %v449, %v435
        %v472 = vpack.c.bf16 %v450, %v402
        %v473 = vpack.c.bf16 %v451, %v403
        %v474 = vpack.c.bf16 %v418, %v464
        %v475 = vpack.c.bf16 %v419, %v465
        %v476 = vpack.c.bf16 %v466, %v466
        %v477 = vpack.c.bf16 %v467, %v467
        %v479 = vsel %vm337, %v240, 0
        %v482 = vsel %vm341, %v476, 0
        %v485 = vsel %vm341, %v477, 0
        %487 = vmatpush.bf16.msra.mxu0 0
        %488 = vmatpush.bf16.msra.mxu0 0
        %489 = vmatpush.bf16.msra.mxu0 0
        %490 = vmatpush.bf16.msra.mxu0 %v482
        %491 = vmatpush.bf16.msra.mxu0 %v474
        %492 = vmatpush.bf16.msra.mxu0 %v472
        %493 = vmatpush.bf16.msra.mxu0 %v470
        %494 = vmatpush.bf16.msra.mxu0 %v468
        %495 = vmatmul.bf16.gmra.mxu0 %v479
        %v496 = vpop.f32.mrf.mxu0
        %v497 = vadd.f32 0.0, %v496
        %v498 = vpop.f32.mrf.mxu0
        %499 = vdwg.mxu0
        %500 = vmatpush.bf16.msra.mxu0 0
        %501 = vmatpush.bf16.msra.mxu0 0
        %502 = vmatpush.bf16.msra.mxu0 0
        %503 = vmatpush.bf16.msra.mxu0 %v485
        %504 = vmatpush.bf16.msra.mxu0 %v475
        %505 = vmatpush.bf16.msra.mxu0 %v473
        %506 = vmatpush.bf16.msra.mxu0 %v471
        %507 = vmatpush.bf16.msra.mxu0 %v469
        %508 = vmatmul.bf16.gmra.mxu0 %v479
        %v509 = vpop.f32.mrf.mxu0
        %v510 = vadd.f32 0.0, %v509
        %v511 = vpop.f32.mrf.mxu0
        %512 = vdwg.mxu0
        %v513 = vadd.f32 %v497, %v510
        %514 = vadd.xlane.f32.xlu0 %v513
        %v515 = vpop.xlane.xlu0 %514
        %v516 = vmul.f32 %v515, 0.00390625
        %v517 = vmul.f32 %v497, %v497
        %v518 = vmul.f32 %v510, %v510
        %v519 = vadd.f32 %v517, %v518
        %520 = vadd.xlane.f32.xlu0 %v519
        %v521 = vpop.xlane.xlu0 %520
        %v522 = vmul.f32 %v521, 0.00390625
        %v523 = vmul.f32 %v516, %v516
        %v524 = vsub.f32 %v522, %v523
        %v525 = vmax.f32 %v524, 0.0
        %v526 = vsub.f32 %v497, %v516
        %v527 = vsub.f32 %v510, %v516
        %v528 = vadd.f32 %v525, 1e-05
        %v529 = vrsqrt.pop %v528
        %v530 = vmul.f32 %v529, %v528
        %v531 = vmul.f32 %v530, %v529
        %v532 = vmul.f32 0.5, %v531
        %v533 = vsub.f32 1.5, %v532
        %v534 = vmul.f32 %v529, %v533
        %vm535 = vweird.f32 %v528
        %vm536 = vweird.f32 %v529
        %vm537 = vmor %vm535, %vm536
        %v538 = vsel %vm537, %v529, %v534
        %v539 = vmul.f32 %v526, %v538
        %v540 = vmul.f32 %v527, %v538
        %v541 = vadd.f32 %v241, %v539
        %v542 = vadd.f32 %v242, %v540
        %543 = vst [vmem:[%s220] sm:$0xff] %v541
        %544 = vst [vmem:[%s220 + $0x8] sm:$0xff] %v542
        %s545 = scalar_lea.vmem %s187, 16 [#allocation2]
        %v546 = vld [vmem:[%s545] sm:$0xff]
        %v547 = vld [vmem:[%s545 + $0x8] sm:$0xff]
        %548 = vrot.lane.b32.xlu0 %v546, 16
        %v549 = vpop.permute.xlu0 %548
        %550 = vrot.lane.b32.xlu0 %v547, 16
        %v551 = vpop.permute.xlu0 %550
        %v552 = vsel %vm247, %v549, %v551
        %v553 = vsel %vm247, %v551, %v549
        %554 = vrot.lane.b32.xlu0 %v546, 112
        %v555 = vpop.permute.xlu0 %554
        %556 = vrot.lane.b32.xlu0 %v547, 112
        %v557 = vpop.permute.xlu0 %556
        %v558 = vsel %vm254, %v555, %v557
        %v559 = vsel %vm254, %v557, %v555
        %v560 = vsel %vm259, %v558, %v553
        %v561 = vsel %vm260, %v559, %v552
        %v562 = vsel %vm265, %v553, %v558
        %v563 = vsel %vm266, %v552, %v559
        %564 = vrot.lane.b32.xlu0 %v560, 1
        %v565 = vpop.permute.xlu0 %564
        %566 = vrot.lane.b32.xlu0 %v561, 1
        %v567 = vpop.permute.xlu0 %566
        %v568 = vsel %vm273, %v565, %v567
        %v569 = vsel %vm273, %v567, %v565
        %570 = vrot.lane.b32.xlu0 %v560, 127
        %v571 = vpop.permute.xlu0 %570
        %572 = vrot.lane.b32.xlu0 %v561, 127
        %v573 = vpop.permute.xlu0 %572
        %v574 = vsel %vm280, %v571, %v573
        %v575 = vsel %vm280, %v573, %v571
        %v576 = vsel %vm285, %v574, %v569
        %v577 = vsel %vm286, %v575, %v568
        %v578 = vsel %vm291, %v569, %v574
        %v579 = vsel %vm292, %v568, %v575
        %580 = vrot.lane.b32.xlu0 %v546, 1
        %v581 = vpop.permute.xlu0 %580
        %582 = vrot.lane.b32.xlu0 %v547, 1
        %v583 = vpop.permute.xlu0 %582
        %v584 = vsel %vm273, %v581, %v583
        %v585 = vsel %vm273, %v583, %v581
        %586 = vrot.lane.b32.xlu0 %v546, 127
        %v587 = vpop.permute.xlu0 %586
        %588 = vrot.lane.b32.xlu0 %v547, 127
        %v589 = vpop.permute.xlu0 %588
        %v590 = vsel %vm280, %v587, %v589
        %v591 = vsel %vm280, %v589, %v587
        %v592 = vsel %vm285, %v590, %v585
        %v593 = vsel %vm286, %v591, %v584
        %v594 = vsel %vm291, %v585, %v590
        %v595 = vsel %vm292, %v584, %v591
        %596 = vrot.lane.b32.xlu0 %v562, 1
        %v597 = vpop.permute.xlu0 %596
        %598 = vrot.lane.b32.xlu0 %v563, 1
        %v599 = vpop.permute.xlu0 %598
        %v600 = vsel %vm273, %v597, %v599
        %v601 = vsel %vm273, %v599, %v597
        %602 = vrot.lane.b32.xlu0 %v562, 127
        %v603 = vpop.permute.xlu0 %602
        %604 = vrot.lane.b32.xlu0 %v563, 127
        %v605 = vpop.permute.xlu0 %604
        %v606 = vsel %vm280, %v603, %v605
        %v607 = vsel %vm280, %v605, %v603
        %v608 = vsel %vm285, %v606, %v601
        %v609 = vsel %vm286, %v607, %v600
        %v610 = vsel %vm291, %v601, %v606
        %v611 = vsel %vm292, %v600, %v607
        %v612 = vpack.c.bf16 %v560, %v576
        %v613 = vpack.c.bf16 %v561, %v577
        %v614 = vpack.c.bf16 %v592, %v578
        %v615 = vpack.c.bf16 %v593, %v579
        %v616 = vpack.c.bf16 %v594, %v546
        %v617 = vpack.c.bf16 %v595, %v547
        %v618 = vpack.c.bf16 %v562, %v608
        %v619 = vpack.c.bf16 %v563, %v609
        %v620 = vpack.c.bf16 %v610, %v610
        %v621 = vpack.c.bf16 %v611, %v611
        %v623 = vsel %vm341, %v620, 0
        %v626 = vsel %vm341, %v621, 0
        %628 = vmatpush.bf16.msra.mxu0 0
        %629 = vmatpush.bf16.msra.mxu0 0
        %630 = vmatpush.bf16.msra.mxu0 0
        %631 = vmatpush.bf16.msra.mxu0 %v623
        %632 = vmatpush.bf16.msra.mxu0 %v618
        %633 = vmatpush.bf16.msra.mxu0 %v616
        %634 = vmatpush.bf16.msra.mxu0 %v614
        %635 = vmatpush.bf16.msra.mxu0 %v612
        %636 = vmatmul.bf16.gmra.mxu0 %v339
        %v637 = vpop.f32.mrf.mxu0
        %v638 = vadd.f32 0.0, %v637
        %v639 = vpop.f32.mrf.mxu0
        %640 = vdwg.mxu0
        %641 = vmatpush.bf16.msra.mxu0 0
        %642 = vmatpush.bf16.msra.mxu0 0
        %643 = vmatpush.bf16.msra.mxu0 0
        %644 = vmatpush.bf16.msra.mxu0 %v626
        %645 = vmatpush.bf16.msra.mxu0 %v619
        %646 = vmatpush.bf16.msra.mxu0 %v617
        %647 = vmatpush.bf16.msra.mxu0 %v615
        %648 = vmatpush.bf16.msra.mxu0 %v613
        %649 = vmatmul.bf16.gmra.mxu0 %v339
        %v650 = vpop.f32.mrf.mxu0
        %v651 = vadd.f32 0.0, %v650
        %v652 = vpop.f32.mrf.mxu0
        %653 = vdwg.mxu0
        %v654 = vadd.f32 %v638, %v651
        %655 = vadd.xlane.f32.xlu0 %v654
        %v656 = vpop.xlane.xlu0 %655
        %v657 = vmul.f32 %v656, 0.00390625
        %v658 = vmul.f32 %v638, %v638
        %v659 = vmul.f32 %v651, %v651
        %v660 = vadd.f32 %v658, %v659
        %661 = vadd.xlane.f32.xlu0 %v660
        %v662 = vpop.xlane.xlu0 %661
        %v663 = vmul.f32 %v662, 0.00390625
        %v664 = vmul.f32 %v657, %v657
        %v665 = vsub.f32 %v663, %v664
        %v666 = vmax.f32 %v665, 0.0
        %v667 = vsub.f32 %v638, %v657
        %v668 = vsub.f32 %v651, %v657
        %v669 = vadd.f32 %v666, 1e-05
        %v670 = vrsqrt.pop %v669
        %v671 = vmul.f32 %v670, %v669
        %v672 = vmul.f32 %v671, %v670
        %v673 = vmul.f32 0.5, %v672
        %v674 = vsub.f32 1.5, %v673
        %v675 = vmul.f32 %v670, %v674
        %vm676 = vweird.f32 %v669
        %vm677 = vweird.f32 %v670
        %vm678 = vmor %vm676, %vm677
        %v679 = vsel %vm678, %v670, %v675
        %v680 = vmul.f32 %v667, %v679
        %v681 = vmul.f32 %v668, %v679
        %v682 = vmax.f32 %v680, 0.0
        %v683 = vmax.f32 %v681, 0.0
        %684 = vrot.lane.b32.xlu0 %v682, 16
        %v685 = vpop.permute.xlu0 %684
        %686 = vrot.lane.b32.xlu0 %v683, 16
        %v687 = vpop.permute.xlu0 %686
        %v688 = vsel %vm247, %v685, %v687
        %v689 = vsel %vm247, %v687, %v685
        %690 = vrot.lane.b32.xlu0 %v682, 112
        %v691 = vpop.permute.xlu0 %690
        %692 = vrot.lane.b32.xlu0 %v683, 112
        %v693 = vpop.permute.xlu0 %692
        %v694 = vsel %vm254, %v691, %v693
        %v695 = vsel %vm254, %v693, %v691
        %v696 = vsel %vm259, %v694, %v689
        %v697 = vsel %vm260, %v695, %v688
        %v698 = vsel %vm265, %v689, %v694
        %v699 = vsel %vm266, %v688, %v695
        %700 = vrot.lane.b32.xlu0 %v696, 1
        %v701 = vpop.permute.xlu0 %700
        %702 = vrot.lane.b32.xlu0 %v697, 1
        %v703 = vpop.permute.xlu0 %702
        %v704 = vsel %vm273, %v701, %v703
        %v705 = vsel %vm273, %v703, %v701
        %706 = vrot.lane.b32.xlu0 %v696, 127
        %v707 = vpop.permute.xlu0 %706
        %708 = vrot.lane.b32.xlu0 %v697, 127
        %v709 = vpop.permute.xlu0 %708
        %v710 = vsel %vm280, %v707, %v709
        %v711 = vsel %vm280, %v709, %v707
        %v712 = vsel %vm285, %v710, %v705
        %v713 = vsel %vm286, %v711, %v704
        %v714 = vsel %vm291, %v705, %v710
        %v715 = vsel %vm292, %v704, %v711
        %716 = vrot.lane.b32.xlu0 %v682, 1
        %v717 = vpop.permute.xlu0 %716
        %718 = vrot.lane.b32.xlu0 %v683, 1
        %v719 = vpop.permute.xlu0 %718
        %v720 = vsel %vm273, %v717, %v719
        %v721 = vsel %vm273, %v719, %v717
        %722 = vrot.lane.b32.xlu0 %v682, 127
        %v723 = vpop.permute.xlu0 %722
        %724 = vrot.lane.b32.xlu0 %v683, 127
        %v725 = vpop.permute.xlu0 %724
        %v726 = vsel %vm280, %v723, %v725
        %v727 = vsel %vm280, %v725, %v723
        %v728 = vsel %vm285, %v726, %v721
        %v729 = vsel %vm286, %v727, %v720
        %v730 = vsel %vm291, %v721, %v726
        %v731 = vsel %vm292, %v720, %v727
        %732 = vrot.lane.b32.xlu0 %v698, 1
        %v733 = vpop.permute.xlu0 %732
        %734 = vrot.lane.b32.xlu0 %v699, 1
        %v735 = vpop.permute.xlu0 %734
        %v736 = vsel %vm273, %v733, %v735
        %v737 = vsel %vm273, %v735, %v733
        %738 = vrot.lane.b32.xlu0 %v698, 127
        %v739 = vpop.permute.xlu0 %738
        %740 = vrot.lane.b32.xlu0 %v699, 127
        %v741 = vpop.permute.xlu0 %740
        %v742 = vsel %vm280, %v739, %v741
        %v743 = vsel %vm280, %v741, %v739
        %v744 = vsel %vm285, %v742, %v737
        %v745 = vsel %vm286, %v743, %v736
        %v746 = vsel %vm291, %v737, %v742
        %v747 = vsel %vm292, %v736, %v743
        %v748 = vpack.c.bf16 %v696, %v712
        %v749 = vpack.c.bf16 %v697, %v713
        %v750 = vpack.c.bf16 %v728, %v714
        %v751 = vpack.c.bf16 %v729, %v715
        %v752 = vpack.c.bf16 %v730, %v682
        %v753 = vpack.c.bf16 %v731, %v683
        %v754 = vpack.c.bf16 %v698, %v744
        %v755 = vpack.c.bf16 %v699, %v745
        %v756 = vpack.c.bf16 %v746, %v746
        %v757 = vpack.c.bf16 %v747, %v747
        %v759 = vsel %vm341, %v756, 0
        %v762 = vsel %vm341, %v757, 0
        %764 = vmatpush.bf16.msra.mxu0 0
        %765 = vmatpush.bf16.msra.mxu0 0
        %766 = vmatpush.bf16.msra.mxu0 0
        %767 = vmatpush.bf16.msra.mxu0 %v759
        %768 = vmatpush.bf16.msra.mxu0 %v754
        %769 = vmatpush.bf16.msra.mxu0 %v752
        %770 = vmatpush.bf16.msra.mxu0 %v750
        %771 = vmatpush.bf16.msra.mxu0 %v748
        %772 = vmatmul.bf16.gmra.mxu0 %v479
        %v773 = vpop.f32.mrf.mxu0
        %v774 = vadd.f32 0.0, %v773
        %v775 = vpop.f32.mrf.mxu0
        %776 = vdwg.mxu0
        %777 = vmatpush.bf16.msra.mxu0 0
        %778 = vmatpush.bf16.msra.mxu0 0
        %779 = vmatpush.bf16.msra.mxu0 0
        %780 = vmatpush.bf16.msra.mxu0 %v762
        %781 = vmatpush.bf16.msra.mxu0 %v755
        %782 = vmatpush.bf16.msra.mxu0 %v753
        %783 = vmatpush.bf16.msra.mxu0 %v751
        %784 = vmatpush.bf16.msra.mxu0 %v749
        %785 = vmatmul.bf16.gmra.mxu0 %v479
        %v786 = vpop.f32.mrf.mxu0
        %v787 = vadd.f32 0.0, %v786
        %v788 = vpop.f32.mrf.mxu0
        %789 = vdwg.mxu0
        %v790 = vadd.f32 %v774, %v787
        %791 = vadd.xlane.f32.xlu0 %v790
        %v792 = vpop.xlane.xlu0 %791
        %v793 = vmul.f32 %v792, 0.00390625
        %v794 = vmul.f32 %v774, %v774
        %v795 = vmul.f32 %v787, %v787
        %v796 = vadd.f32 %v794, %v795
        %797 = vadd.xlane.f32.xlu0 %v796
        %v798 = vpop.xlane.xlu0 %797
        %v799 = vmul.f32 %v798, 0.00390625
        %v800 = vmul.f32 %v793, %v793
        %v801 = vsub.f32 %v799, %v800
        %v802 = vmax.f32 %v801, 0.0
        %v803 = vsub.f32 %v774, %v793
        %v804 = vsub.f32 %v787, %v793
        %v805 = vadd.f32 %v802, 1e-05
        %v806 = vrsqrt.pop %v805
        %v807 = vmul.f32 %v806, %v805
        %v808 = vmul.f32 %v807, %v806
        %v809 = vmul.f32 0.5, %v808
        %v810 = vsub.f32 1.5, %v809
        %v811 = vmul.f32 %v806, %v810
        %vm812 = vweird.f32 %v805
        %vm813 = vweird.f32 %v806
        %vm814 = vmor %vm812, %vm813
        %v815 = vsel %vm814, %v806, %v811
        %v816 = vmul.f32 %v803, %v815
        %v817 = vmul.f32 %v804, %v815
        %v818 = vadd.f32 %v546, %v816
        %v819 = vadd.f32 %v547, %v817
        %s820 = scalar_lea.vmem %s220, 16 [#allocation8]
        %821 = vst [vmem:[%s820] sm:$0xff] %v818
        %822 = vst [vmem:[%s820 + $0x8] sm:$0xff] %v819
        %s823 = sand.u32 %s97, 1
        %s824 = scalar_lea.sflag [#allocation4], %s823
        %s825 = sand.u32 %s97, 1
        %s826 = smul.addr %s825, 32
        %s827 = scalar_lea.vmem [#allocation8], %s826
        // Predicated region
        $region45: #{tpu_custom_call.1} parent=31 // pred_check
          %p828 = pneg %p107
        $region46: #{tpu_custom_call.1} parent=31 // pred_check_branch
          %830 = sbr.rel (%p828) target = $region48
        $region47: #{tpu_custom_call.1} parent=31 // pred_region
          %s831 = smul.u32 2, %s21
          %833 = vsyncadd %s824, 0
          %s834 = smul.addr %s831, 2
          %s835 = smul.addr %s834, 8
          %s836 = scalar_lea.hbm %s3, %s835
          %s837 = sshll.u32 %s827, 4
          %s838 = int_to_ptr.vmem [resolvable:$true] %s837
          %s839 = sshll.u32 %s836, 4
          %s840 = int_to_ptr.hbm [resolvable:$true] %s839
          %845 = dma.vmem_to_hbm [thread:$0]  %s838, 512, %s840, %s824, 256, 256, 16
        $region48: #{tpu_custom_call.1} parent=31 // pred_fallthru
          _
      $region32: #{tpu_custom_call.1} parent=5 // pred_fallthru
        _
      %p846 = scmp.le.s32.totalorder 2, %s16
      // Predicated region
      $region49: #{tpu_custom_call.1} parent=5 // pred_check
        %p847 = pneg %p846
      $region50: #{tpu_custom_call.1} parent=5 // pred_check_branch
        %849 = sbr.rel (%p847) target = $region52
      $region51: #{tpu_custom_call.1} parent=5 // pred_region
        %s850 = ssub.s32 %s16, 2
        // Predicated region
        $region53: #{tpu_custom_call.1} parent=51 // pred_check
          %p851 = pneg %p113
        $region54: #{tpu_custom_call.1} parent=51 // pred_check_branch
          %853 = sbr.rel (%p851) target = $region56
        $region55: #{tpu_custom_call.1} parent=51 // pred_region
          %s854 = sand.u32 %s98, 1
          %s855 = scalar_lea.sflag [#allocation4], %s854
          %s856 = sand.u32 %s98, 1
          %s857 = smul.addr %s856, 32
          %s858 = scalar_lea.vmem [#allocation8], %s857
          %860 = dma.done %s855, 512
        $region56: #{tpu_custom_call.1} parent=51 // pred_fallthru
          _
      $region52: #{tpu_custom_call.1} parent=5 // pred_fallthru
        _
    $region6: #{tpu_custom_call.1} parent=1 // loop_footer
      %s20 = sadd.s32 1, %s16
    $region7: #{tpu_custom_call.1} parent=1 // loop_footer_branch
      %15 = sbr.rel target = $region3
    $region8: #{tpu_custom_call.1} parent=1 // loop_exit
      _
    %861 = vsyncpa [#allocation3], 1
    %s862 = scalar_lea.sflag [#allocation3], 1
    %863 = vsyncpa %s862, 1
    %864 = vsyncpa [#allocation6], 1
    %865 = vsyncpa [#allocation4], 1
    %s866 = scalar_lea.sflag [#allocation4], 1
    %867 = vsyncpa %s866, 1

</llo_original>
